<compile_context>
chip_gen: v6e
topology: v6e:2x2x1
jax: 0.10.0
libtpu: 0.0.40
codegen_flags: <defaults>
</compile_context>

<pallas_src>
import jax
import jax.numpy as jnp
from jax.experimental import pallas as pl
from jax.experimental.pallas import tpu as pltpu


_GRAN = 32                       # row granularity (int8 mask min tile is (32, 128))
_MAX_TM = 1024                   # max tile rows
_PALLAS_MIN_ELEMENTS = 1 << 16   # below this, fused XLA is faster than a launch


def _round_up(x, m):
    return ((x + m - 1) // m) * m


def _num_tensorcores_per_chip():
    """2 on v7x (two TensorCores per chip), 1 on v5e/v6e/unknown."""
    try:
        kind = jax.devices()[0].device_kind.lower()
    except Exception:
        return 1
    return 2 if "7" in kind else 1


def _best_tm(rows_per_split):
    """Largest tm (multiple of _GRAN, <= _MAX_TM) that divides rows_per_split."""
    q = rows_per_split // _GRAN
    for d in range(min(_MAX_TM // _GRAN, q), 0, -1):
        if q % d == 0:
            return _GRAN * d
    return _GRAN


def _choose_layout(total, nsplit):
    """Pick (lanes, rows_padded, tm, needs_pad).

    rows_padded * lanes >= total, rows_padded % (nsplit * tm) == 0,
    tm % _GRAN == 0.  Prefers layouts with zero padding (no wrapper copy)."""
    # 1) copy-free layouts: pure metadata reshape, no jnp.pad.
    for lanes in (1024, 512, 256, 128):
        if total % lanes:
            continue
        rows = total // lanes
        if rows % (_GRAN * nsplit):
            continue
        tm = _best_tm(rows // nsplit)
        steps = rows // tm
        if tm >= 256 or steps <= 64:        # tiling quality is acceptable
            return lanes, rows, tm, False
    # 2) padded layout: minimize padded-row DMA waste + per-step overhead.
    lanes = 1024 if total >= (1 << 17) else 128
    rows = -(-total // lanes)
    base = _round_up(rows, _GRAN * nsplit)
    best = None
    for extra in range(64):
        rp = base + extra * _GRAN * nsplit
        tm = _best_tm(rp // nsplit)
        steps = rp // tm
        waste_rows = rp - rows
        # ~9 B/elem (2 x f32 + int8 mask) at ~1 TB/s ~= 9e-3 ns/elem;
        # ~350 ns fixed cost per grid step.
        cost = waste_rows * lanes * 9e-3 + steps * 350.0
        if best is None or cost < best[0]:
            best = (cost, rp, tm)
    return lanes, best[1], best[2], True


def _normal_loss_sums_kernel(fake_ref, real_ref, mask_ref,
                             fr_ref, ff_ref, rr_ref):
    i = pl.program_id(1)

    # Output blocks are the accumulators: same block index across the
    # (arbitrary) reduction axis, zero-initialized on the first step.
    @pl.when(i == 0)
    def _():
        fr_ref[...] = jnp.zeros_like(fr_ref)
        ff_ref[...] = jnp.zeros_like(ff_ref)
        rr_ref[...] = jnp.zeros_like(rr_ref)

    nrows, lanes = fake_ref.shape
    acc_fr = jnp.zeros((8, lanes), jnp.float32)
    acc_ff = jnp.zeros((8, lanes), jnp.float32)
    acc_rr = jnp.zeros((8, lanes), jnp.float32)

    # Static, tile-aligned 8-row chunks: bounded live vreg set, pure full-vreg
    # VALU work (no XLU reduce inside the hot loop).
    # TODO(synk): on v7x the axis-0 partial sums could be offloaded to the idle
    # MXU (dot with a ones matrix) if the VALU slot becomes binding.
    for k in range(0, nrows, 8):
        mf = mask_ref[k:k + 8, :].astype(jnp.float32)        # int8 {0,1} -> f32
        f = fake_ref[k:k + 8, :].astype(jnp.float32) * mf
        r = real_ref[k:k + 8, :].astype(jnp.float32) * mf
        acc_fr = acc_fr + f * r
        acc_ff = acc_ff + f * f
        acc_rr = acc_rr + r * r

    fr_ref[...] += acc_fr
    ff_ref[...] += acc_ff
    rr_ref[...] += acc_rr


def _normal_loss_ref(grad_fake, grad_real, valid_mask):
    """Pure-JAX reference (equivalent to the boolean-gather formulation)."""
    m = valid_mask != 0
    f = jnp.where(m, grad_fake, 0).astype(jnp.float32)
    r = jnp.where(m, grad_real, 0).astype(jnp.float32)
    prod = jnp.sum(f * r)
    fn = jnp.sqrt(jnp.sum(f * f))
    rn = jnp.sqrt(jnp.sum(r * r))
    return 1.0 - prod / (fn * rn)


def normal_loss(grad_fake, grad_real, valid_mask, *, force_pallas=False):
    assert grad_fake.shape == grad_real.shape == valid_mask.shape
    out_dtype = grad_fake.dtype
    total = grad_fake.size

    # Small-input fast path: launch/padding costs dominate, let XLA fuse it.
    if total < _PALLAS_MIN_ELEMENTS and not force_pallas:
        return _normal_loss_ref(grad_fake, grad_real, valid_mask).astype(out_dtype)

    nsplit = _num_tensorcores_per_chip()
    if nsplit > 1 and total < (1 << 20):
        nsplit = 1                       # not worth splitting tiny work across TCs

    lanes, rows_padded, tm, _ = _choose_layout(total, nsplit)
    blocks_per_split = rows_padded // nsplit // tm

    f = grad_fake.reshape(-1)
    r = grad_real.reshape(-1)
    m = (valid_mask.reshape(-1) != 0).astype(jnp.int8)   # 1 B/elem mask stream

    pad = rows_padded * lanes - total
    if pad:
        # TODO(synk): the ragged tail could be masked in-kernel (iota vs. a
        # scalar-prefetched element count) to avoid these copies entirely.
        f = jnp.pad(f, (0, pad))
        r = jnp.pad(r, (0, pad))
        m = jnp.pad(m, (0, pad))          # mask pads with 0 -> padding is inert
    f2 = f.reshape(rows_padded, lanes)
    r2 = r.reshape(rows_padded, lanes)
    m2 = m.reshape(rows_padded, lanes)

    in_map = lambda c, i: (c * blocks_per_split + i, 0)
    out_map = lambda c, i: (c, 0)

    if nsplit == 2:
        dim_sem = (pltpu.CORE_PARALLEL, pltpu.ARBITRARY)   # real cross-TC split
    else:
        dim_sem = ("arbitrary", "arbitrary")

    itemsize = (jnp.dtype(grad_fake.dtype).itemsize
                + jnp.dtype(grad_real.dtype).itemsize + 1)
    vmem_limit = int(min(2 * tm * lanes * itemsize + (4 << 20), 96 << 20))

    sums = pl.pallas_call(
        _normal_loss_sums_kernel,
        out_shape=(
            jax.ShapeDtypeStruct((nsplit * 8, lanes), jnp.float32),  # sum(f*r)
            jax.ShapeDtypeStruct((nsplit * 8, lanes), jnp.float32),  # sum(f*f)
            jax.ShapeDtypeStruct((nsplit * 8, lanes), jnp.float32),  # sum(r*r)
        ),
        grid_spec=pltpu.PrefetchScalarGridSpec(
            num_scalar_prefetch=0,
            grid=(nsplit, blocks_per_split),
            in_specs=[
                pl.BlockSpec((tm, lanes), in_map),
                pl.BlockSpec((tm, lanes), in_map),
                pl.BlockSpec((tm, lanes), in_map),
            ],
            out_specs=[
                pl.BlockSpec((8, lanes), out_map),
                pl.BlockSpec((8, lanes), out_map),
                pl.BlockSpec((8, lanes), out_map),
            ],
        ),
        compiler_params=pltpu.CompilerParams(
            dimension_semantics=dim_sem,
            vmem_limit_bytes=vmem_limit,
        ),
    )(f2, r2, m2)

    s_fr = jnp.sum(sums[0])
    s_ff = jnp.sum(sums[1])
    s_rr = jnp.sum(sums[2])
    # No epsilon guard: all-invalid mask -> 0/0 = NaN, matching PyTorch.
    loss = 1.0 - s_fr / (jnp.sqrt(s_ff) * jnp.sqrt(s_rr))
    return loss.astype(out_dtype)


if __name__ == "__main__":
    key = jax.random.PRNGKey(0)
    k1, k2, k3 = jax.random.split(key, 3)

    # Small shape consistent with the module's NCHW gradient maps.
    N, C, H, W = 2, 4, 16, 16
    grad_fake = jax.random.normal(k1, (N, C, H, W), dtype=jnp.float32)
    grad_real = jax.random.normal(k2, (N, C, H, W), dtype=jnp.float32)
    valid_mask = jax.random.bernoulli(k3, 0.7, (N, C, H, W))

    ref = _normal_loss_ref(grad_fake, grad_real, valid_mask)

    # 1) default path (small input -> fused jnp fast path)
    out_auto = jax.block_until_ready(normal_loss(grad_fake, grad_real, valid_mask))
    assert jnp.allclose(out_auto, ref, rtol=1e-5, atol=1e-5), (out_auto, ref)

    # 2) force the Pallas kernel on the small shape (exercises the padded layout)
    out_pallas = jax.block_until_ready(
        normal_loss(grad_fake, grad_real, valid_mask, force_pallas=True))
    assert jnp.allclose(out_pallas, ref, rtol=1e-5, atol=1e-5), (out_pallas, ref)

    # 3) an aligned shape that takes the copy-free Pallas layout (no jnp.pad)
    k4, k5, k6 = jax.random.split(jax.random.PRNGKey(1), 3)
    N2, C2, H2, W2 = 2, 4, 64, 64          # 32768 elems -> (32, 1024) tiles
    gf2 = jax.random.normal(k4, (N2, C2, H2, W2), dtype=jnp.float32)
    gr2 = jax.random.normal(k5, (N2, C2, H2, W2), dtype=jnp.float32)
    vm2 = jax.random.bernoulli(k6, 0.5, (N2, C2, H2, W2))
    ref2 = _normal_loss_ref(gf2, gr2, vm2)
    out2 = jax.block_until_ready(normal_loss(gf2, gr2, vm2, force_pallas=True))
    assert jnp.allclose(out2, ref2, rtol=1e-5, atol=1e-5), (out2, ref2)

    print("KERNEL_OK")
</pallas_src>

<mosaic_0001>
module attributes {stable_mosaic.version = 11 : i64} {
  func.func @_normal_loss_sums_kernel(%arg0: i32, %arg1: i32, %arg2: memref<32x128xf32, #tpu.memory_space<vmem>>, %arg3: memref<32x128xf32, #tpu.memory_space<vmem>>, %arg4: memref<32x128xi8, #tpu.memory_space<vmem>>, %arg5: memref<8x128xf32, #tpu.memory_space<vmem>>, %arg6: memref<8x128xf32, #tpu.memory_space<vmem>>, %arg7: memref<8x128xf32, #tpu.memory_space<vmem>>) attributes {dimension_semantics = [#tpu.dimension_semantics<arbitrary>, #tpu.dimension_semantics<arbitrary>], iteration_bounds = array<i64: 1, 1>, scalar_prefetch = 0 : i64, scratch_operands = 0 : i64, tpu.core_type = #tpu.core_type<tc>, window_params = [{transform_indices = @transform_0, window_bounds = array<i64: 32, 128>}, {transform_indices = @transform_1, window_bounds = array<i64: 32, 128>}, {transform_indices = @transform_2, window_bounds = array<i64: 32, 128>}, {transform_indices = @transform_3, window_bounds = array<i64: 8, 128>}, {transform_indices = @transform_4, window_bounds = array<i64: 8, 128>}, {transform_indices = @transform_5, window_bounds = array<i64: 8, 128>}]} {
    %c0_i32 = arith.constant 0 : i32
    %0 = arith.cmpi eq, %arg1, %c0_i32 : i32
    %1 = arith.extui %0 : i1 to i32
    %c0_i32_0 = arith.constant 0 : i32
    %2 = arith.cmpi ne, %1, %c0_i32_0 : i32
    scf.if %2 {
      %cst_35 = arith.constant 0.000000e+00 : f32
      %63 = vector.broadcast %cst_35 : f32 to vector<8x128xf32>
      %c0_36 = arith.constant 0 : index
      %c0_37 = arith.constant 0 : index
      %64 = vector.load %arg5[%c0_36, %c0_37] : memref<8x128xf32, #tpu.memory_space<vmem>>, vector<8x128xf32>
      tpu.vector_store %arg5[%c0_36, %c0_37], %63 {strides = array<i32>} : memref<8x128xf32, #tpu.memory_space<vmem>>, vector<8x128xf32>,
      %cst_38 = arith.constant 0.000000e+00 : f32
      %65 = vector.broadcast %cst_38 : f32 to vector<8x128xf32>
      %c0_39 = arith.constant 0 : index
      %c0_40 = arith.constant 0 : index
      %66 = vector.load %arg6[%c0_39, %c0_40] : memref<8x128xf32, #tpu.memory_space<vmem>>, vector<8x128xf32>
      tpu.vector_store %arg6[%c0_39, %c0_40], %65 {strides = array<i32>} : memref<8x128xf32, #tpu.memory_space<vmem>>, vector<8x128xf32>,
      %cst_41 = arith.constant 0.000000e+00 : f32
      %67 = vector.broadcast %cst_41 : f32 to vector<8x128xf32>
      %c0_42 = arith.constant 0 : index
      %c0_43 = arith.constant 0 : index
      %68 = vector.load %arg7[%c0_42, %c0_43] : memref<8x128xf32, #tpu.memory_space<vmem>>, vector<8x128xf32>
      tpu.vector_store %arg7[%c0_42, %c0_43], %67 {strides = array<i32>} : memref<8x128xf32, #tpu.memory_space<vmem>>, vector<8x128xf32>,
    } else {
    }
    %cst = arith.constant 0.000000e+00 : f32
    %3 = vector.broadcast %cst : f32 to vector<8x128xf32>
    %cst_1 = arith.constant 0.000000e+00 : f32
    %4 = vector.broadcast %cst_1 : f32 to vector<8x128xf32>
    %cst_2 = arith.constant 0.000000e+00 : f32
    %5 = vector.broadcast %cst_2 : f32 to vector<8x128xf32>
    %c0 = arith.constant 0 : index
    %c0_3 = arith.constant 0 : index
    %6 = vector.load %arg4[%c0, %c0_3] : memref<32x128xi8, #tpu.memory_space<vmem>>, vector<8x128xi8>
    %7 = arith.sitofp %6 : vector<8x128xi8> to vector<8x128xf32>
    %c0_4 = arith.constant 0 : index
    %c0_5 = arith.constant 0 : index
    %8 = vector.load %arg2[%c0_4, %c0_5] : memref<32x128xf32, #tpu.memory_space<vmem>>, vector<8x128xf32>
    %9 = arith.mulf %8, %7 : vector<8x128xf32>
    %c0_6 = arith.constant 0 : index
    %c0_7 = arith.constant 0 : index
    %10 = vector.load %arg3[%c0_6, %c0_7] : memref<32x128xf32, #tpu.memory_space<vmem>>, vector<8x128xf32>
    %11 = arith.mulf %10, %7 : vector<8x128xf32>
    %12 = arith.mulf %9, %11 : vector<8x128xf32>
    %13 = arith.addf %3, %12 : vector<8x128xf32>
    %14 = arith.mulf %9, %9 : vector<8x128xf32>
    %15 = arith.addf %4, %14 : vector<8x128xf32>
    %16 = arith.mulf %11, %11 : vector<8x128xf32>
    %17 = arith.addf %5, %16 : vector<8x128xf32>
    %c8 = arith.constant 8 : index
    %c0_8 = arith.constant 0 : index
    %18 = vector.load %arg4[%c8, %c0_8] : memref<32x128xi8, #tpu.memory_space<vmem>>, vector<8x128xi8>
    %19 = arith.sitofp %18 : vector<8x128xi8> to vector<8x128xf32>
    %c8_9 = arith.constant 8 : index
    %c0_10 = arith.constant 0 : index
    %20 = vector.load %arg2[%c8_9, %c0_10] : memref<32x128xf32, #tpu.memory_space<vmem>>, vector<8x128xf32>
    %21 = arith.mulf %20, %19 : vector<8x128xf32>
    %c8_11 = arith.constant 8 : index
    %c0_12 = arith.constant 0 : index
    %22 = vector.load %arg3[%c8_11, %c0_12] : memref<32x128xf32, #tpu.memory_space<vmem>>, vector<8x128xf32>
    %23 = arith.mulf %22, %19 : vector<8x128xf32>
    %24 = arith.mulf %21, %23 : vector<8x128xf32>
    %25 = arith.addf %13, %24 : vector<8x128xf32>
    %26 = arith.mulf %21, %21 : vector<8x128xf32>
    %27 = arith.addf %15, %26 : vector<8x128xf32>
    %28 = arith.mulf %23, %23 : vector<8x128xf32>
    %29 = arith.addf %17, %28 : vector<8x128xf32>
    %c16 = arith.constant 16 : index
    %c0_13 = arith.constant 0 : index
    %30 = vector.load %arg4[%c16, %c0_13] : memref<32x128xi8, #tpu.memory_space<vmem>>, vector<8x128xi8>
    %31 = arith.sitofp %30 : vector<8x128xi8> to vector<8x128xf32>
    %c16_14 = arith.constant 16 : index
    %c0_15 = arith.constant 0 : index
    %32 = vector.load %arg2[%c16_14, %c0_15] : memref<32x128xf32, #tpu.memory_space<vmem>>, vector<8x128xf32>
    %33 = arith.mulf %32, %31 : vector<8x128xf32>
    %c16_16 = arith.constant 16 : index
    %c0_17 = arith.constant 0 : index
    %34 = vector.load %arg3[%c16_16, %c0_17] : memref<32x128xf32, #tpu.memory_space<vmem>>, vector<8x128xf32>
    %35 = arith.mulf %34, %31 : vector<8x128xf32>
    %36 = arith.mulf %33, %35 : vector<8x128xf32>
    %37 = arith.addf %25, %36 : vector<8x128xf32>
    %38 = arith.mulf %33, %33 : vector<8x128xf32>
    %39 = arith.addf %27, %38 : vector<8x128xf32>
    %40 = arith.mulf %35, %35 : vector<8x128xf32>
    %41 = arith.addf %29, %40 : vector<8x128xf32>
    %c24 = arith.constant 24 : index
    %c0_18 = arith.constant 0 : index
    %42 = vector.load %arg4[%c24, %c0_18] : memref<32x128xi8, #tpu.memory_space<vmem>>, vector<8x128xi8>
    %43 = arith.sitofp %42 : vector<8x128xi8> to vector<8x128xf32>
    %c24_19 = arith.constant 24 : index
    %c0_20 = arith.constant 0 : index
    %44 = vector.load %arg2[%c24_19, %c0_20] : memref<32x128xf32, #tpu.memory_space<vmem>>, vector<8x128xf32>
    %45 = arith.mulf %44, %43 : vector<8x128xf32>
    %c24_21 = arith.constant 24 : index
    %c0_22 = arith.constant 0 : index
    %46 = vector.load %arg3[%c24_21, %c0_22] : memref<32x128xf32, #tpu.memory_space<vmem>>, vector<8x128xf32>
    %47 = arith.mulf %46, %43 : vector<8x128xf32>
    %48 = arith.mulf %45, %47 : vector<8x128xf32>
    %49 = arith.addf %37, %48 : vector<8x128xf32>
    %50 = arith.mulf %45, %45 : vector<8x128xf32>
    %51 = arith.addf %39, %50 : vector<8x128xf32>
    %52 = arith.mulf %47, %47 : vector<8x128xf32>
    %53 = arith.addf %41, %52 : vector<8x128xf32>
    %c0_23 = arith.constant 0 : index
    %c0_24 = arith.constant 0 : index
    %54 = vector.load %arg5[%c0_23, %c0_24] : memref<8x128xf32, #tpu.memory_space<vmem>>, vector<8x128xf32>
    %55 = arith.addf %54, %49 : vector<8x128xf32>
    %c0_25 = arith.constant 0 : index
    %c0_26 = arith.constant 0 : index
    %56 = vector.load %arg5[%c0_25, %c0_26] : memref<8x128xf32, #tpu.memory_space<vmem>>, vector<8x128xf32>
    tpu.vector_store %arg5[%c0_25, %c0_26], %55 {strides = array<i32>} : memref<8x128xf32, #tpu.memory_space<vmem>>, vector<8x128xf32>,
    %c0_27 = arith.constant 0 : index
    %c0_28 = arith.constant 0 : index
    %57 = vector.load %arg6[%c0_27, %c0_28] : memref<8x128xf32, #tpu.memory_space<vmem>>, vector<8x128xf32>
    %58 = arith.addf %57, %51 : vector<8x128xf32>
    %c0_29 = arith.constant 0 : index
    %c0_30 = arith.constant 0 : index
    %59 = vector.load %arg6[%c0_29, %c0_30] : memref<8x128xf32, #tpu.memory_space<vmem>>, vector<8x128xf32>
    tpu.vector_store %arg6[%c0_29, %c0_30], %58 {strides = array<i32>} : memref<8x128xf32, #tpu.memory_space<vmem>>, vector<8x128xf32>,
    %c0_31 = arith.constant 0 : index
    %c0_32 = arith.constant 0 : index
    %60 = vector.load %arg7[%c0_31, %c0_32] : memref<8x128xf32, #tpu.memory_space<vmem>>, vector<8x128xf32>
    %61 = arith.addf %60, %53 : vector<8x128xf32>
    %c0_33 = arith.constant 0 : index
    %c0_34 = arith.constant 0 : index
    %62 = vector.load %arg7[%c0_33, %c0_34] : memref<8x128xf32, #tpu.memory_space<vmem>>, vector<8x128xf32>
    tpu.vector_store %arg7[%c0_33, %c0_34], %61 {strides = array<i32>} : memref<8x128xf32, #tpu.memory_space<vmem>>, vector<8x128xf32>,
    return
  }
  func.func @transform_0(%arg0: i32, %arg1: i32) -> (i32, i32) {
    %c1_i32 = arith.constant 1 : i32
    %0 = arith.muli %arg0, %c1_i32 : i32
    %1 = arith.addi %0, %arg1 : i32
    %c0_i32 = arith.constant 0 : i32
    %c0_i32_0 = arith.constant 0 : i32
    return %1, %c0_i32 : i32, i32
  }
  func.func @transform_1(%arg0: i32, %arg1: i32) -> (i32, i32) {
    %c1_i32 = arith.constant 1 : i32
    %0 = arith.muli %arg0, %c1_i32 : i32
    %1 = arith.addi %0, %arg1 : i32
    %c0_i32 = arith.constant 0 : i32
    %c0_i32_0 = arith.constant 0 : i32
    return %1, %c0_i32 : i32, i32
  }
  func.func @transform_2(%arg0: i32, %arg1: i32) -> (i32, i32) {
    %c1_i32 = arith.constant 1 : i32
    %0 = arith.muli %arg0, %c1_i32 : i32
    %1 = arith.addi %0, %arg1 : i32
    %c0_i32 = arith.constant 0 : i32
    %c0_i32_0 = arith.constant 0 : i32
    return %1, %c0_i32 : i32, i32
  }
  func.func @transform_3(%arg0: i32, %arg1: i32) -> (i32, i32) {
    %c0_i32 = arith.constant 0 : i32
    %c0_i32_0 = arith.constant 0 : i32
    return %arg0, %c0_i32 : i32, i32
  }
  func.func @transform_4(%arg0: i32, %arg1: i32) -> (i32, i32) {
    %c0_i32 = arith.constant 0 : i32
    %c0_i32_0 = arith.constant 0 : i32
    return %arg0, %c0_i32 : i32, i32
  }
  func.func @transform_5(%arg0: i32, %arg1: i32) -> (i32, i32) {
    %c0_i32 = arith.constant 0 : i32
    %c0_i32_0 = arith.constant 0 : i32
    return %arg0, %c0_i32 : i32, i32
  }
}

</mosaic_0001>

<llo_original>
// kernel: tpu_custom_call.1
$region0: #{tpu_custom_call.1}
  #allocation0 [shape = 'u32[]', space=smem, size = 0x4, offset = 0x4, fixed_abs, tag = 'smem constant byte address 0x4 - core index']
  #allocation1 [shape = 'u32[144,128]{1,0:T(1,128)}', space=vmem, size = 0x12000, scoped, tag = 'internal scratch']
  %s0 = inlined_call_operand.hbm [shape: f32[32,128], index: 0, kind: input, shape index: {}]
  %s1 = inlined_call_operand.hbm [shape: f32[32,128], index: 1, kind: input, shape index: {}]
  %s2 = inlined_call_operand.hbm [shape: s8[32,128], index: 2, kind: input, shape index: {}]
  %s3 = inlined_call_operand.hbm [shape: f32[8,128], index: 3, kind: output, shape index: {0}]
  %s4 = inlined_call_operand.hbm [shape: f32[8,128], index: 4, kind: output, shape index: {1}]
  %s5 = inlined_call_operand.hbm [shape: f32[8,128], index: 5, kind: output, shape index: {2}]
  %6 = xla_tuple %s3, %s4, %s5
  %s7 = sld [smem:[#allocation0]]
  $region54: #{tpu_custom_call.1} parent=0
    _
  %s9 = ssub.s32 1, %s7
  %s10 = scalar_select 0, %s9, %s7
  $region1: #{tpu_custom_call.1} parent=0
    #allocation2 [shape = 'u8[16384]{0}', space=vmem, size = 0x4000, scoped, tag = 'input window, operand 0, single buffered']
    #allocation3 [shape = 's32[1]{0}', space=sflag, size = 0x4, scoped, tag = 'scoped memory for tpu_custom_call.1']
    #allocation4 [shape = 's32[1]{0}', space=sflag, size = 0x4, scoped, tag = 'scoped memory for tpu_custom_call.1']
    #allocation5 [shape = 'u8[16384]{0}', space=vmem, size = 0x4000, scoped, tag = 'input window, operand 1, single buffered']
    #allocation6 [shape = 's32[1]{0}', space=sflag, size = 0x4, scoped, tag = 'scoped memory for tpu_custom_call.1']
    #allocation7 [shape = 'u8[4096]{0}', space=vmem, size = 0x1000, scoped, tag = 'input window, operand 2, single buffered']
    #allocation8 [shape = 'u8[4096]{0}', space=vmem, size = 0x1000, scoped, tag = 'output window, operand 0, single buffered']
    #allocation9 [shape = 'u8[4096]{0}', space=vmem, size = 0x1000, scoped, tag = 'output window, operand 1, single buffered']
    #allocation10 [shape = 's32[1]{0}', space=sflag, size = 0x4, scoped, tag = 'scoped memory for tpu_custom_call.1']
    #allocation11 [shape = 'u8[4096]{0}', space=vmem, size = 0x1000, scoped, tag = 'output window, operand 2, single buffered']
    %11 = vsyncpa [#allocation3], 0
    %12 = vsyncpa [#allocation6], 0
    %13 = vsyncpa [#allocation4], 0
    %14 = vsyncpa [#allocation10], 0
    // Predicated region
    $region2: #{tpu_custom_call.1} parent=1 // pred_check
      _
    $region3: #{tpu_custom_call.1} parent=1 // pred_check_branch
      %16 = sbr.rel (0) target = $region5
    $region4: #{tpu_custom_call.1} parent=1 // pred_region
      %s17 = sadd.s32 0, 0
      %s18 = smul.u32 4, %s17
      %s20 = ssub.s32 512, 512
      %21 = vsyncadd [#allocation3], %s20
      %s22 = smul.addr %s18, 128
      %s23 = scalar_lea.hbm %s0, %s22
      %s24 = sshll.u32 [#allocation2], 4
      %s25 = int_to_ptr.vmem [resolvable:$true] %s24
      %30 = dma.hbm_to_vmem [thread:$0]  %s23, 512, %s25, [#allocation3], 128, 128, 8
    $region5: #{tpu_custom_call.1} parent=1 // pred_fallthru
      _
    // Predicated region
    $region6: #{tpu_custom_call.1} parent=1 // pred_check
      _
    $region7: #{tpu_custom_call.1} parent=1 // pred_check_branch
      %32 = sbr.rel (0) target = $region9
    $region8: #{tpu_custom_call.1} parent=1 // pred_region
      %s33 = sadd.s32 0, 0
      %s34 = smul.u32 4, %s33
      %s36 = ssub.s32 512, 512
      %37 = vsyncadd [#allocation6], %s36
      %s38 = smul.addr %s34, 128
      %s39 = scalar_lea.hbm %s1, %s38
      %s40 = sshll.u32 [#allocation5], 4
      %s41 = int_to_ptr.vmem [resolvable:$true] %s40
      %46 = dma.hbm_to_vmem [thread:$0]  %s39, 512, %s41, [#allocation6], 128, 128, 8
    $region9: #{tpu_custom_call.1} parent=1 // pred_fallthru
      _
    // Predicated region
    $region10: #{tpu_custom_call.1} parent=1 // pred_check
      _
    $region11: #{tpu_custom_call.1} parent=1 // pred_check_branch
      %48 = sbr.rel (0) target = $region13
    $region12: #{tpu_custom_call.1} parent=1 // pred_region
      %s49 = sadd.s32 0, 0
      %s51 = ssub.s32 128, 128
      %52 = vsyncadd [#allocation6], %s51
      %s53 = smul.addr %s49, 128
      %s54 = scalar_lea.hbm %s2, %s53
      %s56 = sshll.u32 [#allocation7], 4
      %s57 = int_to_ptr.vmem [resolvable:$true] %s56
      %59 = dma.hbm_to_vmem [thread:$0]  %s54, 128, %s57, [#allocation6]
    $region13: #{tpu_custom_call.1} parent=1 // pred_fallthru
      _
    // Predicated region
    $region14: #{tpu_custom_call.1} parent=1 // pred_check
      _
    $region15: #{tpu_custom_call.1} parent=1 // pred_check_branch
      %61 = sbr.rel (0) target = $region17
    $region16: #{tpu_custom_call.1} parent=1 // pred_region
      %62 = dma.done [#allocation3], 512
    $region17: #{tpu_custom_call.1} parent=1 // pred_fallthru
      _
    // Predicated region
    $region18: #{tpu_custom_call.1} parent=1 // pred_check
      _
    $region19: #{tpu_custom_call.1} parent=1 // pred_check_branch
      %64 = sbr.rel (0) target = $region21
    $region20: #{tpu_custom_call.1} parent=1 // pred_region
      %65 = dma.done [#allocation6], 512
    $region21: #{tpu_custom_call.1} parent=1 // pred_fallthru
      _
    // Predicated region
    $region22: #{tpu_custom_call.1} parent=1 // pred_check
      _
    $region23: #{tpu_custom_call.1} parent=1 // pred_check_branch
      %67 = sbr.rel (0) target = $region25
    $region24: #{tpu_custom_call.1} parent=1 // pred_region
      %68 = dma.done [#allocation6], 128
    $region25: #{tpu_custom_call.1} parent=1 // pred_fallthru
      _
    %s69 = sadd.s32 0, 0
    %s70 = smul.u32 4, %s69
    %s71 = sadd.s32 0, 0
    %s72 = smul.u32 4, %s71
    %s73 = sadd.s32 0, 0
    %p74 = scmp.eq.s32.totalorder 0, 0
    // Predicated region
    $region26: #{tpu_custom_call.1} parent=1 // pred_check
      %p75 = pneg %p74
    $region27: #{tpu_custom_call.1} parent=1 // pred_check_branch
      %77 = sbr.rel (%p75) target = $region29
    $region28: #{tpu_custom_call.1} parent=1 // pred_region
      %78 = vst [vmem:[#allocation8] sm:$0xff] 0.0
      %79 = vst [vmem:[#allocation9] sm:$0xff] 0.0
      %80 = vst [vmem:[#allocation11] sm:$0xff] 0.0
    $region29: #{tpu_custom_call.1} parent=1 // pred_fallthru
      _
    %v81 = vld [vmem:[#allocation7] sm:$0x3]
    %v82 = vunpack.c.0.s8 %v81
    %v83 = vcvt.s32.f32 %v82
    %v84 = vld [vmem:[#allocation2] sm:$0xff]
    %v85 = vmul.f32 %v84, %v83
    %v86 = vld [vmem:[#allocation5] sm:$0xff]
    %v87 = vmul.f32 %v86, %v83
    %v88 = vmul.f32 %v85, %v87
    %v89 = vadd.f32 %v88, 0.0
    %v90 = vmul.f32 %v85, %v85
    %v91 = vadd.f32 %v90, 0.0
    %v92 = vmul.f32 %v87, %v87
    %v93 = vadd.f32 %v92, 0.0
    %v94 = vld [vmem:[#allocation7] sm:$0xc]
    %v95 = vrot.slane %v94, 2
    %v96 = vunpack.c.0.s8 %v95
    %v97 = vcvt.s32.f32 %v96
    %v98 = vld [vmem:[#allocation2 + $0x8] sm:$0xff]
    %v99 = vmul.f32 %v98, %v97
    %v100 = vld [vmem:[#allocation5 + $0x8] sm:$0xff]
    %v101 = vmul.f32 %v100, %v97
    %v102 = vmul.f32 %v99, %v101
    %v103 = vadd.f32 %v89, %v102
    %v104 = vmul.f32 %v99, %v99
    %v105 = vadd.f32 %v91, %v104
    %v106 = vmul.f32 %v101, %v101
    %v107 = vadd.f32 %v93, %v106
    %v108 = vld [vmem:[#allocation7] sm:$0x30]
    %v109 = vrot.slane %v108, 4
    %v110 = vunpack.c.0.s8 %v109
    %v111 = vcvt.s32.f32 %v110
    %v112 = vld [vmem:[#allocation2 + $0x10] sm:$0xff]
    %v113 = vmul.f32 %v112, %v111
    %v114 = vld [vmem:[#allocation5 + $0x10] sm:$0xff]
    %v115 = vmul.f32 %v114, %v111
    %v116 = vmul.f32 %v113, %v115
    %v117 = vadd.f32 %v103, %v116
    %v118 = vmul.f32 %v113, %v113
    %v119 = vadd.f32 %v105, %v118
    %v120 = vmul.f32 %v115, %v115
    %v121 = vadd.f32 %v107, %v120
    %v122 = vld [vmem:[#allocation7] sm:$0xc0]
    %v123 = vrot.slane %v122, 6
    %v124 = vunpack.c.0.s8 %v123
    %v125 = vcvt.s32.f32 %v124
    %v126 = vld [vmem:[#allocation2 + $0x18] sm:$0xff]
    %v127 = vmul.f32 %v126, %v125
    %v128 = vld [vmem:[#allocation5 + $0x18] sm:$0xff]
    %v129 = vmul.f32 %v128, %v125
    %v130 = vmul.f32 %v127, %v129
    %v131 = vadd.f32 %v117, %v130
    %v132 = vmul.f32 %v127, %v127
    %v133 = vadd.f32 %v119, %v132
    %v134 = vmul.f32 %v129, %v129
    %v135 = vadd.f32 %v121, %v134
    %v136 = vld [vmem:[#allocation8] sm:$0xff]
    %v137 = vadd.f32 %v136, %v131
    %138 = vst [vmem:[#allocation8] sm:$0xff] %v137
    %v139 = vld [vmem:[#allocation9] sm:$0xff]
    %v140 = vadd.f32 %v139, %v133
    %141 = vst [vmem:[#allocation9] sm:$0xff] %v140
    %v142 = vld [vmem:[#allocation11] sm:$0xff]
    %v143 = vadd.f32 %v142, %v135
    %144 = vst [vmem:[#allocation11] sm:$0xff] %v143
    // Predicated region
    $region30: #{tpu_custom_call.1} parent=1 // pred_check
      _
    $region31: #{tpu_custom_call.1} parent=1 // pred_check_branch
      %146 = sbr.rel (0) target = $region33
    $region32: #{tpu_custom_call.1} parent=1 // pred_region
      %s148 = ssub.s32 128, 128
      %149 = vsyncadd [#allocation4], %s148
      %s151 = sshll.u32 [#allocation8], 4
      %s152 = int_to_ptr.vmem [resolvable:$true] %s151
      %154 = dma.vmem_to_hbm [thread:$0]  %s152, 128, %s3, [#allocation4]
    $region33: #{tpu_custom_call.1} parent=1 // pred_fallthru
      _
    // Predicated region
    $region34: #{tpu_custom_call.1} parent=1 // pred_check
      _
    $region35: #{tpu_custom_call.1} parent=1 // pred_check_branch
      %156 = sbr.rel (0) target = $region37
    $region36: #{tpu_custom_call.1} parent=1 // pred_region
      %s158 = ssub.s32 128, 128
      %159 = vsyncadd [#allocation10], %s158
      %s161 = sshll.u32 [#allocation9], 4
      %s162 = int_to_ptr.vmem [resolvable:$true] %s161
      %164 = dma.vmem_to_hbm [thread:$0]  %s162, 128, %s4, [#allocation10]
    $region37: #{tpu_custom_call.1} parent=1 // pred_fallthru
      _
    // Predicated region
    $region38: #{tpu_custom_call.1} parent=1 // pred_check
      _
    $region39: #{tpu_custom_call.1} parent=1 // pred_check_branch
      %166 = sbr.rel (0) target = $region41
    $region40: #{tpu_custom_call.1} parent=1 // pred_region
      %s168 = ssub.s32 128, 128
      %169 = vsyncadd [#allocation10], %s168
      %s171 = sshll.u32 [#allocation11], 4
      %s172 = int_to_ptr.vmem [resolvable:$true] %s171
      %174 = dma.vmem_to_hbm [thread:$0]  %s172, 128, %s5, [#allocation10]
    $region41: #{tpu_custom_call.1} parent=1 // pred_fallthru
      _
    // Predicated region
    $region42: #{tpu_custom_call.1} parent=1 // pred_check
      _
    $region43: #{tpu_custom_call.1} parent=1 // pred_check_branch
      %176 = sbr.rel (0) target = $region45
    $region44: #{tpu_custom_call.1} parent=1 // pred_region
      %177 = dma.done [#allocation4], 128
    $region45: #{tpu_custom_call.1} parent=1 // pred_fallthru
      _
    // Predicated region
    $region46: #{tpu_custom_call.1} parent=1 // pred_check
      _
    $region47: #{tpu_custom_call.1} parent=1 // pred_check_branch
      %179 = sbr.rel (0) target = $region49
    $region48: #{tpu_custom_call.1} parent=1 // pred_region
      %180 = dma.done [#allocation10], 128
    $region49: #{tpu_custom_call.1} parent=1 // pred_fallthru
      _
    // Predicated region
    $region50: #{tpu_custom_call.1} parent=1 // pred_check
      _
    $region51: #{tpu_custom_call.1} parent=1 // pred_check_branch
      %182 = sbr.rel (0) target = $region53
    $region52: #{tpu_custom_call.1} parent=1 // pred_region
      %183 = dma.done [#allocation10], 128
    $region53: #{tpu_custom_call.1} parent=1 // pred_fallthru
      _
    %184 = vsyncpa [#allocation3], 1
    %185 = vsyncpa [#allocation6], 1
    %186 = vsyncpa [#allocation4], 1
    %187 = vsyncpa [#allocation10], 1

</llo_original>
